<compile_context>
chip_gen: v6e
topology: v6e:2x2x1
jax: 0.10.0
libtpu: 0.0.40
codegen_flags: <defaults>
</compile_context>

<pallas_src>
import math
import functools

import jax
import jax.numpy as jnp
from jax.experimental import pallas as pl
from jax.experimental.pallas import tpu as pltpu


# ----------------------------------------------------------------------------
# Pallas kernel: fused conv(all k) -> ReLU -> GAP accumulate -> fused heads
# ----------------------------------------------------------------------------
def _fused_backbone_kernel(patches_ref, wconv_ref, bconv_ref, whead_ref,
                           bhead_ref, out_ref, acc_ref, *, inv_hw):
    # patches_ref: (Bt, St, CK) bf16     wconv_ref: (CK, k*hid) bf16
    # bconv_ref:   (1, k*hid)  f32       whead_ref: (k*hid, KOpad) f32
    # bhead_ref:   (1, KOpad)  f32       out_ref:   (1, Bt, KOpad) f32
    # acc_ref:     (Bt, 1, k*hid) f32 scratch (persists across spatial steps)
    si = pl.program_id(1)
    bt = patches_ref.shape[0]

    @pl.when(si == 0)
    def _init():
        acc_ref[...] = jnp.zeros_like(acc_ref)

    wconv = wconv_ref[...]                         # hoisted: loaded once
    bconv = bconv_ref[...]

    # Chunk the M dimension per batch element: each chunk is a (St, k*hid) f32
    # intermediate (<= ~256 KiB by construction of St) instead of one
    # (Bt*St, k*hid) tensor that would round-trip through VMEM.
    def body(bi, carry):
        blk = patches_ref[bi]                      # (St, CK) bf16
        h = jnp.dot(blk, wconv, preferred_element_type=jnp.float32)
        h = jnp.maximum(h + bconv, 0.0)            # bias + ReLU, f32 (v5e VPU)
        # partial global-average-pool: sum over this spatial tile.
        acc_ref[bi] = acc_ref[bi] + jnp.sum(h, axis=0, keepdims=True)
        return carry

    jax.lax.fori_loop(0, bt, body, 0, unroll=True)

    @pl.when(si == pl.num_programs(1) - 1)
    def _finalize():
        feat = acc_ref[...].reshape(bt, -1) * inv_hw        # (Bt, k*hid) mean
        # block-diagonal heads packed into one lane-dense (.., 128) matmul.
        out_ref[0] = (jnp.dot(feat, whead_ref[...],
                              preferred_element_type=jnp.float32)
                      + bhead_ref[...])                     # (Bt, KOpad)


# ----------------------------------------------------------------------------
# Glue
# ----------------------------------------------------------------------------
def _round_up(x, m):
    return ((x + m - 1) // m) * m


def im2col_3x3(x):
    """x: (B, C, H, W) f32 NCHW -> (B, H*W, 9*C) bf16 patches.

    Cast to bf16 *before* the 9x inflation, and build the patch features in
    ((kh, kw), c) order from an NHWC view so only stack+reshape (no transpose
    of the inflated tensor) is needed.
    """
    B, C, H, W = x.shape
    xh = jnp.transpose(x.astype(jnp.bfloat16), (0, 2, 3, 1))   # (B,H,W,C)
    xp = jnp.pad(xh, ((0, 0), (1, 1), (1, 1), (0, 0)))
    cols = [xp[:, kh:kh + H, kw:kw + W, :]                     # (B,H,W,C)
            for kh in range(3) for kw in range(3)]
    pat = jnp.stack(cols, axis=3)                              # (B,H,W,9,C)
    return pat.reshape(B, H * W, 9 * C)


def _pick_batch_tile(b):
    """Largest batch tile <= 8 dividing b that leaves >= 2 batch blocks
    (keeps both v7x TensorCores busy through the 'parallel' grid axis)."""
    for bt in range(min(8, b), 0, -1):
        if b % bt == 0 and b // bt >= 2:
            return bt
    return b          # b == 1


def _pick_spatial_tile(hw, bt, ck_padded, kh_dim,
                       vmem_block_budget=20 * 1024 * 1024,
                       chunk_bytes=256 * 1024):
    """Largest divisor of H*W that is a multiple of 8 (sublane dim), keeps the
    double-buffered bf16 patch block under `vmem_block_budget` (safe on v7x's
    64 MiB VMEM), and keeps the per-batch-element (St, k*hid) f32 conv
    intermediate under `chunk_bytes`."""
    rows_budget = vmem_block_budget // (2 * 2 * bt * ck_padded)  # bf16, 2 bufs
    rows_chunk = chunk_bytes // (4 * kh_dim)                     # f32 chunk
    cap = max(8, (min(rows_budget, rows_chunk) // 8) * 8)
    if hw <= cap:
        return hw
    best = None
    for st in range(8, cap + 1, 8):
        if hw % st == 0:
            best = st
    return best if best is not None else hw   # fallback: one spatial block


class NeuralEigenFunctionsPallas:
    """k eigenfunctions, share=False, normalize_over=[0], momentum EMA."""

    def __init__(self, k, in_planes, num_classes, hidden=32, momentum=0.9,
                 key=None):
        self.k = k
        self.momentum = momentum
        self.hidden = hidden
        self.out_dim = num_classes if num_classes != 2 else 1
        self.ko_dim = k * self.out_dim
        self.ko_pad = _round_up(self.ko_dim, 128)   # lane-dense epilogue/store
        key = jax.random.PRNGKey(0) if key is None else key
        k1, k2, k3, k4 = jax.random.split(key, 4)
        C = in_planes
        ck = C * 9
        kh_dim = k * hidden

        # Per-function conv weights, PyTorch layout (hidden, C, 3, 3), fused
        # along the output-channel axis into (9*C, k*hidden) with the im2col
        # feature order ((kh,kw) major, channel minor); bf16 for the MXU path.
        wconv = jax.random.normal(k1, (k, hidden, C, 3, 3),
                                  jnp.float32) * (1.0 / math.sqrt(ck))
        wconv = jnp.transpose(wconv, (3, 4, 2, 0, 1)).reshape(ck, kh_dim)
        self.wconv = wconv.astype(jnp.bfloat16)
        self.bconv = (jax.random.normal(k2, (k, hidden), jnp.float32)
                      * 0.01).reshape(1, kh_dim)

        # Per-function heads packed block-diagonally, zero-padded to 128 out
        # lanes: (k*hidden, ko_pad).
        wlin = jax.random.normal(k3, (k, hidden, self.out_dim),
                                 jnp.float32) * (1.0 / math.sqrt(hidden))
        whead = jnp.zeros((kh_dim, self.ko_pad), jnp.float32)
        for ki in range(k):
            whead = whead.at[ki * hidden:(ki + 1) * hidden,
                             ki * self.out_dim:(ki + 1) * self.out_dim].set(
                                 wlin[ki])
        self.whead = whead
        bhead = jnp.zeros((1, self.ko_pad), jnp.float32)
        bhead = bhead.at[0, :self.ko_dim].set(
            (jax.random.normal(k4, (k, self.out_dim), jnp.float32)
             * 0.01).reshape(-1))
        self.bhead = bhead

        # register_buffer equivalents.  NOTE: eigennorm starts at zero exactly
        # like the reference (no epsilon), so calling eval before any training
        # step divides by zero — same behaviour as the PyTorch module.
        self.eigennorm = jnp.zeros((k,), jnp.float32)
        self.num_calls = 0

    # Pallas-backed part of forward (everything up to the stacked raw heads).
    def forward_raw(self, x):
        B, C, H, W = x.shape
        k, hidden, out_dim = self.k, self.hidden, self.out_dim
        kh_dim = k * hidden
        hw = H * W
        patches = im2col_3x3(x)                               # (B, HW, 9C) bf16
        ck = patches.shape[-1]

        bt = _pick_batch_tile(B)
        nb = B // bt
        st = _pick_spatial_tile(hw, bt, _round_up(ck, 128), kh_dim)

        heads = pl.pallas_call(
            functools.partial(_fused_backbone_kernel, inv_hw=1.0 / float(hw)),
            out_shape=jax.ShapeDtypeStruct((nb, bt, self.ko_pad), jnp.float32),
            grid_spec=pltpu.PrefetchScalarGridSpec(
                num_scalar_prefetch=0,
                grid=(nb, hw // st),
                in_specs=[
                    pl.BlockSpec((bt, st, ck), lambda bi, si: (bi, si, 0)),
                    pl.BlockSpec((ck, kh_dim), lambda bi, si: (0, 0)),
                    pl.BlockSpec((1, kh_dim), lambda bi, si: (0, 0)),
                    pl.BlockSpec((kh_dim, self.ko_pad),
                                 lambda bi, si: (0, 0)),
                    pl.BlockSpec((1, self.ko_pad), lambda bi, si: (0, 0)),
                ],
                out_specs=pl.BlockSpec((1, bt, self.ko_pad),
                                       lambda bi, si: (bi, 0, 0)),
                scratch_shapes=[pltpu.VMEM((bt, 1, kh_dim), jnp.float32)],
            ),
            compiler_params=pltpu.CompilerParams(
                dimension_semantics=("parallel", "arbitrary"),
                vmem_limit_bytes=48 * 1024 * 1024),
        )(patches, self.wconv, self.bconv, self.whead, self.bhead)

        heads = heads.reshape(B, self.ko_pad)[:, :self.ko_dim]
        # torch.stack([f(x) for f in fs], -1).flatten(0, 1) -> (B*out_dim, k)
        return heads.reshape(B, k, out_dim).transpose(0, 2, 1).reshape(
            B * out_dim, k)

    def __call__(self, x, training=True):
        ret_raw = self.forward_raw(x)
        if training:
            n_rows = ret_raw.shape[0]
            # norm over dim 0 / sqrt(N); no epsilon, matching the reference.
            norm_ = jnp.sqrt(jnp.sum(ret_raw * ret_raw, axis=0)) / math.sqrt(
                float(n_rows))
            # running-buffer bookkeeping (torch.no_grad() block) kept in glue.
            # NOTE: python-side mutation — keep this path un-jitted.
            if self.num_calls == 0:
                self.eigennorm = norm_
            else:
                self.eigennorm = (self.eigennorm * self.momentum
                                  + norm_ * (1.0 - self.momentum))
            self.num_calls += 1
            return ret_raw / norm_
        return ret_raw / self.eigennorm


# Pure-JAX reference of the Pallas-backed part (same bf16 input rounding,
# f32 accumulation) for a tolerance-asserted correctness check.
def _ref_forward_raw(model, x):
    B = x.shape[0]
    patches = im2col_3x3(x).astype(jnp.float32)
    h = jnp.einsum('bpc,cd->bpd', patches, model.wconv.astype(jnp.float32))
    h = jnp.maximum(h + model.bconv, 0.0)
    feat = jnp.mean(h, axis=1)                                # (B, k*hidden)
    heads = feat @ model.whead + model.bhead                  # (B, ko_pad)
    heads = heads[:, :model.ko_dim]
    return heads.reshape(B, model.k, model.out_dim).transpose(0, 2, 1).reshape(
        B * model.out_dim, model.k)


if __name__ == "__main__":
    key = jax.random.PRNGKey(0)
    kx, kparams = jax.random.split(key)

    B, C, H, W = 2, 4, 16, 16
    k, num_classes, hidden = 4, 10, 32

    x = jax.random.normal(kx, (B, C, H, W), jnp.float32)
    model = NeuralEigenFunctionsPallas(k=k, in_planes=C,
                                       num_classes=num_classes,
                                       hidden=hidden, key=kparams)

    # Tolerance-asserted pure-JAX reference before benchmarking/normalization.
    raw_kernel = model.forward_raw(x)
    raw_ref = _ref_forward_raw(model, x)
    jax.block_until_ready((raw_kernel, raw_ref))
    assert raw_kernel.shape == (B * num_classes, k)
    assert bool(jnp.all(jnp.isfinite(raw_kernel)))
    assert bool(jnp.allclose(raw_kernel, raw_ref, rtol=5e-2, atol=1e-2)), (
        float(jnp.max(jnp.abs(raw_kernel - raw_ref))))

    out_train = model(x, training=True)    # training path: computes norm_,
                                           # initializes eigennorm (num_calls=0)
    out_eval = model(x, training=False)    # eval path: divides by eigennorm
    jax.block_until_ready((out_train, out_eval))

    assert out_train.shape == (B * num_classes, k)
    assert out_eval.shape == (B * num_classes, k)
    assert bool(jnp.all(jnp.isfinite(out_train)))
    assert bool(jnp.all(jnp.isfinite(out_eval)))
    print("KERNEL_OK")
</pallas_src>

<mosaic_0001>
module attributes {stable_mosaic.version = 11 : i64} {
  func.func @_fused_backbone_kernel(%arg0: i32, %arg1: i32, %arg2: memref<1x256x36xbf16, #tpu.memory_space<vmem>>, %arg3: memref<36x128xbf16, #tpu.memory_space<vmem>>, %arg4: memref<1x128xf32, #tpu.memory_space<vmem>>, %arg5: memref<128x128xf32, #tpu.memory_space<vmem>>, %arg6: memref<1x128xf32, #tpu.memory_space<vmem>>, %arg7: memref<1x1x128xf32, #tpu.memory_space<vmem>>, %arg8: memref<1x1x128xf32, #tpu.memory_space<vmem>>) attributes {dimension_semantics = [#tpu.dimension_semantics<parallel>, #tpu.dimension_semantics<arbitrary>], iteration_bounds = array<i64: 2, 1>, scalar_prefetch = 0 : i64, scratch_operands = 1 : i64, tpu.core_type = #tpu.core_type<tc>, window_params = [{transform_indices = @transform_0, window_bounds = array<i64: 1, 256, 36>}, {pipeline_mode = #tpu.pipeline_mode<synchronous>, transform_indices = @transform_1, window_bounds = array<i64: 36, 128>}, {pipeline_mode = #tpu.pipeline_mode<synchronous>, transform_indices = @transform_2, window_bounds = array<i64: 1, 128>}, {pipeline_mode = #tpu.pipeline_mode<synchronous>, transform_indices = @transform_3, window_bounds = array<i64: 128, 128>}, {pipeline_mode = #tpu.pipeline_mode<synchronous>, transform_indices = @transform_4, window_bounds = array<i64: 1, 128>}, {transform_indices = @transform_5, window_bounds = array<i64: 1, 1, 128>}]} {
    %c0_i32 = arith.constant 0 : i32
    %0 = arith.cmpi eq, %arg1, %c0_i32 : i32
    %1 = arith.extui %0 : i1 to i32
    %c0_i32_0 = arith.constant 0 : i32
    %2 = arith.cmpi ne, %1, %c0_i32_0 : i32
    scf.if %2 {
      %cst_15 = arith.constant 0.000000e+00 : f32
      %26 = vector.broadcast %cst_15 : f32 to vector<1x1x128xf32>
      %c0_16 = arith.constant 0 : index
      %c0_17 = arith.constant 0 : index
      %c0_18 = arith.constant 0 : index
      %27 = vector.load %arg8[%c0_16, %c0_17, %c0_18] : memref<1x1x128xf32, #tpu.memory_space<vmem>>, vector<1x1x128xf32>
      tpu.vector_store %arg8[%c0_16, %c0_17, %c0_18], %26 {strides = array<i32>} : memref<1x1x128xf32, #tpu.memory_space<vmem>>, vector<1x1x128xf32>,
    } else {
    }
    %c0 = arith.constant 0 : index
    %c0_1 = arith.constant 0 : index
    %3 = vector.load %arg3[%c0, %c0_1] : memref<36x128xbf16, #tpu.memory_space<vmem>>, vector<36x128xbf16>
    %c0_2 = arith.constant 0 : index
    %c0_3 = arith.constant 0 : index
    %4 = vector.load %arg4[%c0_2, %c0_3] : memref<1x128xf32, #tpu.memory_space<vmem>>, vector<1x128xf32>
    %c0_i32_4 = arith.constant 0 : i32
    %5 = arith.index_cast %c0_i32_4 : i32 to index
    %c0_5 = arith.constant 0 : index
    %c0_6 = arith.constant 0 : index
    %6 = vector.load %arg2[%5, %c0_5, %c0_6] : memref<1x256x36xbf16, #tpu.memory_space<vmem>>, vector<1x256x36xbf16>
    %7 = vector.shape_cast %6 : vector<1x256x36xbf16> to vector<256x36xbf16>
    %cst = arith.constant dense<0.000000e+00> : vector<256x128xf32>
    %8 = tpu.matmul %7, %3, %cst {dimension_numbers = #tpu.dot_dimension_numbers<[1], [0], [0], [1], [0, 0, 1, 1], [], []>} : vector<256x36xbf16>, vector<36x128xbf16>, vector<256x128xf32> -> vector<256x128xf32>
    %9 = vector.broadcast %4 : vector<1x128xf32> to vector<256x128xf32>
    %10 = arith.addf %8, %9 : vector<256x128xf32>
    %cst_7 = arith.constant 0.000000e+00 : f32
    %11 = vector.broadcast %cst_7 : f32 to vector<256x128xf32>
    %12 = arith.maximumf %10, %11 : vector<256x128xf32>
    %13 = arith.index_cast %c0_i32_4 : i32 to index
    %c0_8 = arith.constant 0 : index
    %c0_9 = arith.constant 0 : index
    %14 = vector.load %arg8[%13, %c0_8, %c0_9] : memref<1x1x128xf32, #tpu.memory_space<vmem>>, vector<1x1x128xf32>
    %15 = vector.shape_cast %14 : vector<1x1x128xf32> to vector<1x128xf32>
    %cst_10 = arith.constant dense<0.000000e+00> : vector<128xf32>
    %16 = vector.multi_reduction <add>, %12, %cst_10 [0] : vector<256x128xf32> to vector<128xf32>
    %17 = vector.shape_cast %16 : vector<128xf32> to vector<1x128xf32>
    %18 = arith.addf %15, %17 : vector<1x128xf32>
    %19 = arith.index_cast %c0_i32_4 : i32 to index
    %c0_11 = arith.constant 0 : index
    %c0_12 = arith.constant 0 : index
    %20 = vector.load %arg8[%19, %c0_11, %c0_12] : memref<1x1x128xf32, #tpu.memory_space<vmem>>, vector<1x1x128xf32>
    %21 = vector.shape_cast %20 : vector<1x1x128xf32> to vector<1x128xf32>
    %22 = vector.shape_cast %18 : vector<1x128xf32> to vector<1x1x128xf32>
    tpu.vector_store %arg8[%19, %c0_11, %c0_12], %22 {strides = array<i32>} : memref<1x1x128xf32, #tpu.memory_space<vmem>>, vector<1x1x128xf32>,
    %c1_i32 = arith.constant 1 : i32
    %c0_i32_13 = arith.constant 0 : i32
    %23 = arith.cmpi eq, %arg1, %c0_i32_13 : i32
    %24 = arith.extui %23 : i1 to i32
    %c0_i32_14 = arith.constant 0 : i32
    %25 = arith.cmpi ne, %24, %c0_i32_14 : i32
    scf.if %25 {
      %c0_15 = arith.constant 0 : index
      %c0_16 = arith.constant 0 : index
      %c0_17 = arith.constant 0 : index
      %26 = vector.load %arg8[%c0_15, %c0_16, %c0_17] : memref<1x1x128xf32, #tpu.memory_space<vmem>>, vector<1x1x128xf32>
      %27 = vector.shape_cast %26 : vector<1x1x128xf32> to vector<1x128xf32>
      %cst_18 = arith.constant 3.906250e-03 : f32
      %28 = vector.broadcast %cst_18 : f32 to vector<1x128xf32>
      %29 = arith.mulf %27, %28 : vector<1x128xf32>
      %c0_19 = arith.constant 0 : index
      %c0_20 = arith.constant 0 : index
      %30 = vector.load %arg5[%c0_19, %c0_20] : memref<128x128xf32, #tpu.memory_space<vmem>>, vector<128x128xf32>
      %cst_21 = arith.constant dense<0.000000e+00> : vector<1x128xf32>
      %31 = tpu.matmul %29, %30, %cst_21 {dimension_numbers = #tpu.dot_dimension_numbers<[1], [0], [0], [1], [0, 0, 1, 1], [], []>} : vector<1x128xf32>, vector<128x128xf32>, vector<1x128xf32> -> vector<1x128xf32>
      %c0_22 = arith.constant 0 : index
      %c0_23 = arith.constant 0 : index
      %32 = vector.load %arg6[%c0_22, %c0_23] : memref<1x128xf32, #tpu.memory_space<vmem>>, vector<1x128xf32>
      %33 = arith.addf %31, %32 : vector<1x128xf32>
      %c0_24 = arith.constant 0 : index
      %c0_25 = arith.constant 0 : index
      %c0_26 = arith.constant 0 : index
      %34 = vector.load %arg7[%c0_24, %c0_25, %c0_26] : memref<1x1x128xf32, #tpu.memory_space<vmem>>, vector<1x1x128xf32>
      %35 = vector.shape_cast %34 : vector<1x1x128xf32> to vector<1x128xf32>
      %36 = vector.shape_cast %33 : vector<1x128xf32> to vector<1x1x128xf32>
      tpu.vector_store %arg7[%c0_24, %c0_25, %c0_26], %36 {strides = array<i32>} : memref<1x1x128xf32, #tpu.memory_space<vmem>>, vector<1x1x128xf32>,
    } else {
    }
    return
  }
  func.func @transform_0(%arg0: i32, %arg1: i32) -> (i32, i32, i32) {
    %c0_i32 = arith.constant 0 : i32
    %c0_i32_0 = arith.constant 0 : i32
    return %arg0, %arg1, %c0_i32 : i32, i32, i32
  }
  func.func @transform_1(%arg0: i32, %arg1: i32) -> (i32, i32) {
    %c0_i32 = arith.constant 0 : i32
    %c0_i32_0 = arith.constant 0 : i32
    %c0_i32_1 = arith.constant 0 : i32
    return %c0_i32, %c0_i32_0 : i32, i32
  }
  func.func @transform_2(%arg0: i32, %arg1: i32) -> (i32, i32) {
    %c0_i32 = arith.constant 0 : i32
    %c0_i32_0 = arith.constant 0 : i32
    %c0_i32_1 = arith.constant 0 : i32
    return %c0_i32, %c0_i32_0 : i32, i32
  }
  func.func @transform_3(%arg0: i32, %arg1: i32) -> (i32, i32) {
    %c0_i32 = arith.constant 0 : i32
    %c0_i32_0 = arith.constant 0 : i32
    %c0_i32_1 = arith.constant 0 : i32
    return %c0_i32, %c0_i32_0 : i32, i32
  }
  func.func @transform_4(%arg0: i32, %arg1: i32) -> (i32, i32) {
    %c0_i32 = arith.constant 0 : i32
    %c0_i32_0 = arith.constant 0 : i32
    %c0_i32_1 = arith.constant 0 : i32
    return %c0_i32, %c0_i32_0 : i32, i32
  }
  func.func @transform_5(%arg0: i32, %arg1: i32) -> (i32, i32, i32) {
    %c0_i32 = arith.constant 0 : i32
    %c0_i32_0 = arith.constant 0 : i32
    %c0_i32_1 = arith.constant 0 : i32
    return %arg0, %c0_i32, %c0_i32_0 : i32, i32, i32
  }
}

</mosaic_0001>

<llo_original>
// kernel: tpu_custom_call.1
$region0: #{tpu_custom_call.1}
  #allocation0 [shape = 'u32[]', space=smem, size = 0x4, offset = 0x4, fixed_abs, tag = 'smem constant byte address 0x4 - core index']
  #allocation1 [shape = 'u32[144,128]{1,0:T(1,128)}', space=vmem, size = 0x12000, scoped, tag = 'internal scratch']
  #allocation2 [shape = 'f32[1,1,128]{2,1,0:T(1,128)}', space=vmem, size = 0x200, scoped, tag = 'scratch operand']
  %s0 = inlined_call_operand.vmem [shape: bf16[2,256,36], index: 0, kind: input, shape index: {}]
  %s1 = inlined_call_operand.vmem [shape: bf16[36,128], index: 1, kind: input, shape index: {}]
  %s2 = inlined_call_operand.vmem [shape: f32[1,128], index: 2, kind: input, shape index: {}]
  %s3 = inlined_call_operand.vmem [shape: f32[128,128], index: 3, kind: input, shape index: {}]
  %s4 = inlined_call_operand.vmem [shape: f32[1,128], index: 4, kind: input, shape index: {}]
  %s5 = inlined_call_operand.hbm [shape: f32[2,1,128], index: 5, kind: output, shape index: {}]
  %s6 = sld [smem:[#allocation0]]
  $region61: #{tpu_custom_call.1} parent=0
    _
  %s8 = ssub.s32 1, %s6
  %s9 = scalar_select 0, %s8, %s6
  $region1: #{tpu_custom_call.1} parent=0
    #allocation3 [shape = 'u8[1024]{0}', space=vmem, size = 0x400, scoped, tag = 'output window, operand 0']
    #allocation4 [shape = 's32[2]{0}', space=sflag, size = 0x8, scoped, tag = 'scoped memory for tpu_custom_call.1']
    %10 = vsyncpa [#allocation4], 0
    %s11 = scalar_lea.sflag [#allocation4], 1
    %12 = vsyncpa %s11, 0
    loop: start=0, step=1, limit=4
    $region2: #{tpu_custom_call.1} parent=1 // loop_pre_header
      _
    $region3: #{tpu_custom_call.1} parent=1 // loop_header
      %s14 = sphi 0, %s18
      %p15 = scmp.ge.s32.totalorder %s14, 4
      %s21 = sphi 0, %s33
      %s22 = sphi 0, %s29
      %s23 = sphi 0, %s21
      %s24 = sphi 0, %s22
      %s25 = sphi 0, %s23
      %s26 = sphi 0, %s24
      %s38 = sphi 0, %s40
      %s41 = sphi 0, %s38
      %s42 = sphi 0, %s41
      %s58 = sphi 0, %s42
      %s62 = sphi 0, %s62
      %s64 = sphi 0, %s62
      %s65 = sphi 0, %s64
      %s79 = sphi 0, %s65
      %s83 = sphi 0, %s83
      %s85 = sphi 0, %s83
      %s86 = sphi 0, %s85
      %s100 = sphi 0, %s86
      %s104 = sphi 0, %s104
      %s106 = sphi 0, %s104
      %s107 = sphi 0, %s106
      %s121 = sphi 0, %s107
      %s125 = sphi 0, %s125
      %s127 = sphi 0, %s125
      %s128 = sphi 0, %s127
      %s142 = sphi 0, %s128
      %s148 = sphi 0, %s150
      %s151 = sphi 0, %s148
      %s152 = sphi 0, %s151
      %s168 = sphi 0, %s152
    $region4: #{tpu_custom_call.1} parent=1 // loop_header_branch
      %17 = sbr.rel (%p15) target = $region8
    $region5: #{tpu_custom_call.1} parent=1 // loop_body
      %s19 = ssub.s32 %s14, 1
      %s20 = ssub.s32 %s14, 2
      %s27 = sadd.s32 1, %s22
      %p28 = scmp.ge.s32.totalorder %s27, 1
      %s29 = scalar_select %p28, 0, %s27
      %s30 = sadd.s32 1, %s21
      %s31 = scalar_select %p28, %s30, %s21
      %p32 = scmp.ge.s32.totalorder %s31, 2
      %s33 = scalar_select %p32, 0, %s31
      %s34 = ssub.s32 %s21, %s33
      %s35 = ssub.s32 %s22, %s29
      %s36 = sor.u32 %s34, %s35
      %p37 = scmp.eq.s32.totalorder %s36, 0
      %s39 = sadd.s32 %s38, 1
      %s40 = scalar_select %p37, %s38, %s39
      %p43 = pneg %p37
      %p44 = scmp.eq.s32.totalorder %s14, 1
      %p45 = por %p43, %p44
      %p46 = scmp.ne.s32.totalorder %s38, %s41
      %p47 = scmp.eq.s32.totalorder %s14, 0
      %p48 = por %p46, %p47
      %p49 = scmp.ne.s32.totalorder %s38, %s41
      %p50 = scmp.eq.s32.totalorder %s19, 1
      %p51 = por %p49, %p50
      %p52 = scmp.ne.s32.totalorder %s41, %s42
      %p53 = scmp.eq.s32.totalorder %s19, 0
      %p54 = por %p52, %p53
      %p55 = scmp.ne.s32.totalorder %s41, %s42
      %p56 = scmp.eq.s32.totalorder %s20, 1
      %p57 = por %p55, %p56
      %p59 = scmp.ne.s32.totalorder %s42, %s58
      %p60 = scmp.eq.s32.totalorder %s20, 0
      %p61 = por %p59, %p60
      %s63 = sadd.s32 %s62, 1
      %p66 = scmp.eq.s32.totalorder %s14, 1
      %p67 = scmp.ne.s32.totalorder %s62, %s64
      %p68 = scmp.eq.s32.totalorder %s14, 0
      %p69 = por %p67, %p68
      %p70 = scmp.ne.s32.totalorder %s62, %s64
      %p71 = scmp.eq.s32.totalorder %s19, 1
      %p72 = por %p70, %p71
      %p73 = scmp.ne.s32.totalorder %s64, %s65
      %p74 = scmp.eq.s32.totalorder %s19, 0
      %p75 = por %p73, %p74
      %p76 = scmp.ne.s32.totalorder %s64, %s65
      %p77 = scmp.eq.s32.totalorder %s20, 1
      %p78 = por %p76, %p77
      %p80 = scmp.ne.s32.totalorder %s65, %s79
      %p81 = scmp.eq.s32.totalorder %s20, 0
      %p82 = por %p80, %p81
      %s84 = sadd.s32 %s83, 1
      %p87 = scmp.eq.s32.totalorder %s14, 1
      %p88 = scmp.ne.s32.totalorder %s83, %s85
      %p89 = scmp.eq.s32.totalorder %s14, 0
      %p90 = por %p88, %p89
      %p91 = scmp.ne.s32.totalorder %s83, %s85
      %p92 = scmp.eq.s32.totalorder %s19, 1
      %p93 = por %p91, %p92
      %p94 = scmp.ne.s32.totalorder %s85, %s86
      %p95 = scmp.eq.s32.totalorder %s19, 0
      %p96 = por %p94, %p95
      %p97 = scmp.ne.s32.totalorder %s85, %s86
      %p98 = scmp.eq.s32.totalorder %s20, 1
      %p99 = por %p97, %p98
      %p101 = scmp.ne.s32.totalorder %s86, %s100
      %p102 = scmp.eq.s32.totalorder %s20, 0
      %p103 = por %p101, %p102
      %s105 = sadd.s32 %s104, 1
      %p108 = scmp.eq.s32.totalorder %s14, 1
      %p109 = scmp.ne.s32.totalorder %s104, %s106
      %p110 = scmp.eq.s32.totalorder %s14, 0
      %p111 = por %p109, %p110
      %p112 = scmp.ne.s32.totalorder %s104, %s106
      %p113 = scmp.eq.s32.totalorder %s19, 1
      %p114 = por %p112, %p113
      %p115 = scmp.ne.s32.totalorder %s106, %s107
      %p116 = scmp.eq.s32.totalorder %s19, 0
      %p117 = por %p115, %p116
      %p118 = scmp.ne.s32.totalorder %s106, %s107
      %p119 = scmp.eq.s32.totalorder %s20, 1
      %p120 = por %p118, %p119
      %p122 = scmp.ne.s32.totalorder %s107, %s121
      %p123 = scmp.eq.s32.totalorder %s20, 0
      %p124 = por %p122, %p123
      %s126 = sadd.s32 %s125, 1
      %p129 = scmp.eq.s32.totalorder %s14, 1
      %p130 = scmp.ne.s32.totalorder %s125, %s127
      %p131 = scmp.eq.s32.totalorder %s14, 0
      %p132 = por %p130, %p131
      %p133 = scmp.ne.s32.totalorder %s125, %s127
      %p134 = scmp.eq.s32.totalorder %s19, 1
      %p135 = por %p133, %p134
      %p136 = scmp.ne.s32.totalorder %s127, %s128
      %p137 = scmp.eq.s32.totalorder %s19, 0
      %p138 = por %p136, %p137
      %p139 = scmp.ne.s32.totalorder %s127, %s128
      %p140 = scmp.eq.s32.totalorder %s20, 1
      %p141 = por %p139, %p140
      %p143 = scmp.ne.s32.totalorder %s128, %s142
      %p144 = scmp.eq.s32.totalorder %s20, 0
      %p145 = por %p143, %p144
      %s146 = ssub.s32 %s21, %s33
      %p147 = scmp.eq.s32.totalorder %s146, 0
      %s149 = sadd.s32 %s148, 1
      %s150 = scalar_select %p147, %s148, %s149
      %p153 = pneg %p147
      %p154 = scmp.eq.s32.totalorder %s14, 1
      %p155 = por %p153, %p154
      %p156 = scmp.ne.s32.totalorder %s148, %s151
      %p157 = scmp.eq.s32.totalorder %s14, 0
      %p158 = por %p156, %p157
      %p159 = scmp.ne.s32.totalorder %s148, %s151
      %p160 = scmp.eq.s32.totalorder %s19, 1
      %p161 = por %p159, %p160
      %p162 = scmp.ne.s32.totalorder %s151, %s152
      %p163 = scmp.eq.s32.totalorder %s19, 0
      %p164 = por %p162, %p163
      %p165 = scmp.ne.s32.totalorder %s151, %s152
      %p166 = scmp.eq.s32.totalorder %s20, 1
      %p167 = por %p165, %p166
      %p169 = scmp.ne.s32.totalorder %s152, %s168
      %p170 = scmp.eq.s32.totalorder %s20, 0
      %p171 = por %p169, %p170
      %p172 = scmp.le.s32.totalorder 1, %s14
      %p173 = scmp.lt.s32.totalorder %s14, 3
      %p174 = pnand %p172, %p173
      %p175 = pneg %p174
      // Predicated region
      $region9: #{tpu_custom_call.1} parent=5 // pred_check
        _
      $region10: #{tpu_custom_call.1} parent=5 // pred_check_branch
        %177 = sbr.rel (%p174) target = $region12
      $region11: #{tpu_custom_call.1} parent=5 // pred_region
        %s178 = ssub.s32 %s14, 1
        // Predicated region
        $region13: #{tpu_custom_call.1} parent=11 // pred_check
          %p179 = pneg %p75
        $region14: #{tpu_custom_call.1} parent=11 // pred_check_branch
          %181 = sbr.rel (%p179) target = $region16
        $region15: #{tpu_custom_call.1} parent=11 // pred_region
          _
        $region16: #{tpu_custom_call.1} parent=11 // pred_fallthru
          _
        // Predicated region
        $region17: #{tpu_custom_call.1} parent=11 // pred_check
          %p182 = pneg %p96
        $region18: #{tpu_custom_call.1} parent=11 // pred_check_branch
          %184 = sbr.rel (%p182) target = $region20
        $region19: #{tpu_custom_call.1} parent=11 // pred_region
          _
        $region20: #{tpu_custom_call.1} parent=11 // pred_fallthru
          _
        // Predicated region
        $region21: #{tpu_custom_call.1} parent=11 // pred_check
          %p185 = pneg %p117
        $region22: #{tpu_custom_call.1} parent=11 // pred_check_branch
          %187 = sbr.rel (%p185) target = $region24
        $region23: #{tpu_custom_call.1} parent=11 // pred_region
          _
        $region24: #{tpu_custom_call.1} parent=11 // pred_fallthru
          _
        // Predicated region
        $region25: #{tpu_custom_call.1} parent=11 // pred_check
          %p188 = pneg %p138
        $region26: #{tpu_custom_call.1} parent=11 // pred_check_branch
          %190 = sbr.rel (%p188) target = $region28
        $region27: #{tpu_custom_call.1} parent=11 // pred_region
          _
        $region28: #{tpu_custom_call.1} parent=11 // pred_fallthru
          _
      $region12: #{tpu_custom_call.1} parent=5 // pred_fallthru
        _
      %p191 = scmp.lt.s32.totalorder %s14, 2
      // Predicated region
      $region29: #{tpu_custom_call.1} parent=5 // pred_check
        %p192 = pneg %p191
      $region30: #{tpu_custom_call.1} parent=5 // pred_check_branch
        %194 = sbr.rel (%p192) target = $region32
      $region31: #{tpu_custom_call.1} parent=5 // pred_region
        // Predicated region
        $region33: #{tpu_custom_call.1} parent=31 // pred_check
          %p195 = pneg %p48
        $region34: #{tpu_custom_call.1} parent=31 // pred_check_branch
          %197 = sbr.rel (%p195) target = $region36
        $region35: #{tpu_custom_call.1} parent=31 // pred_region
          %s198 = smul.u32 32, %s22
          %p199 = scmp.lt.s32.totalorder %s21, 1
          %s200 = scalar_select %p199, %s21, 1
          %p201 = scmp.lt.s32.totalorder %s198, 31
          %s202 = scalar_select %p201, %s198, 31
          %s203 = smul.addr %s200, 32
          %s204 = sadd.s32 %s202, %s203
          %s205 = smul.addr %s204, 4
          %s206 = scalar_lea.vmem %s0, %s205
          %s207 = smul.u32 32, %s22
        $region36: #{tpu_custom_call.1} parent=31 // pred_fallthru
          _
      $region32: #{tpu_custom_call.1} parent=5 // pred_fallthru
        _
      %p208 = scmp.le.s32.totalorder 1, %s14
      %p209 = scmp.lt.s32.totalorder %s14, 3
      %p210 = pnand %p208, %p209
      %p211 = pneg %p210
      // Predicated region
      $region37: #{tpu_custom_call.1} parent=5 // pred_check
        _
      $region38: #{tpu_custom_call.1} parent=5 // pred_check_branch
        %213 = sbr.rel (%p210) target = $region40
      $region39: #{tpu_custom_call.1} parent=5 // pred_region
        %s214 = ssub.s32 %s14, 1
        %s215 = smul.u32 32, %s24
        %p216 = scmp.lt.s32.totalorder %s23, 1
        %s217 = scalar_select %p216, %s23, 1
        %p218 = scmp.lt.s32.totalorder %s215, 31
        %s219 = scalar_select %p218, %s215, 31
        %s220 = smul.addr %s217, 32
        %s221 = sadd.s32 %s219, %s220
        %s222 = smul.addr %s221, 4
        %s223 = scalar_lea.vmem %s0, %s222
        %p224 = pneg %p54
        %p225 = pneg %p51
        %p226 = pneg %p75
        %p227 = pneg %p72
        %p228 = pneg %p96
        %p229 = pneg %p93
        %p230 = pneg %p117
        %p231 = pneg %p114
        %p232 = pneg %p138
        %p233 = pneg %p135
        %p234 = pneg %p164
        %p235 = pneg %p161
        %s236 = sand.u32 %s151, 1
        %s237 = scalar_lea.sflag [#allocation4], %s236
        %s238 = sand.u32 %s151, 1
        %s239 = scalar_lea.vmem [#allocation3], %s238
        %s240 = smul.u32 32, %s24
        %p241 = scmp.lt.s32.totalorder %s23, 1
        %s242 = scalar_select %p241, %s23, 1
        %p243 = scmp.lt.s32.totalorder %s240, 31
        %s244 = scalar_select %p243, %s240, 31
        %s245 = smul.addr %s242, 32
        %s246 = sadd.s32 %s244, %s245
        %s247 = smul.addr %s246, 4
        %s248 = scalar_lea.vmem %s0, %s247
        %s249 = smul.u32 32, %s24
        %p251 = scmp.eq.s32.totalorder %s24, 0
        // Predicated region
        $region41: #{tpu_custom_call.1} parent=39 // pred_check
          %p252 = pneg %p251
        $region42: #{tpu_custom_call.1} parent=39 // pred_check_branch
          %254 = sbr.rel (%p252) target = $region44
        $region43: #{tpu_custom_call.1} parent=39 // pred_region
          %255 = vst [vmem:[#allocation2] sm:$0x1] 0.0
        $region44: #{tpu_custom_call.1} parent=39 // pred_fallthru
          _
        %v256 = vld [vmem:[%s1] sm:$0xf]
        %v257 = vld [vmem:[%s1 + $0x4] sm:$0xf]
        %v258 = vld [vmem:[%s1 + $0x8] sm:$0xf]
        %v259 = vld [vmem:[%s1 + $0xc] sm:$0xf]
        %v260 = vld [vmem:[%s1 + $0x10] sm:$0x3]
        %v261 = vld [vmem:[%s2] sm:$0x1]
        %v262 = vld [vmem:[%s248] sm:$0xf]
        %v263 = vld [vmem:[%s248 + $0x4] sm:$0xf]
        %v264 = vld [vmem:[%s248 + $0x8] sm:$0xf]
        %v265 = vld [vmem:[%s248 + $0xc] sm:$0xf]
        %v266 = vld [vmem:[%s248 + $0x10] sm:$0xf]
        %v267 = vld [vmem:[%s248 + $0x14] sm:$0xf]
        %v268 = vld [vmem:[%s248 + $0x18] sm:$0xf]
        %v269 = vld [vmem:[%s248 + $0x1c] sm:$0xf]
        %v270 = vld [vmem:[%s248 + $0x20] sm:$0xf]
        %v271 = vld [vmem:[%s248 + $0x24] sm:$0xf]
        %v272 = vld [vmem:[%s248 + $0x28] sm:$0xf]
        %v273 = vld [vmem:[%s248 + $0x2c] sm:$0xf]
        %v274 = vld [vmem:[%s248 + $0x30] sm:$0xf]
        %v275 = vld [vmem:[%s248 + $0x34] sm:$0xf]
        %v276 = vld [vmem:[%s248 + $0x38] sm:$0xf]
        %v277 = vld [vmem:[%s248 + $0x3c] sm:$0xf]
        %v278 = vld [vmem:[%s248 + $0x40] sm:$0xf]
        %v279 = vld [vmem:[%s248 + $0x44] sm:$0xf]
        %v280 = vld [vmem:[%s248 + $0x48] sm:$0xf]
        %v281 = vld [vmem:[%s248 + $0x4c] sm:$0xf]
        %v282 = vld [vmem:[%s248 + $0x50] sm:$0xf]
        %v283 = vld [vmem:[%s248 + $0x54] sm:$0xf]
        %v284 = vld [vmem:[%s248 + $0x58] sm:$0xf]
        %v285 = vld [vmem:[%s248 + $0x5c] sm:$0xf]
        %v286 = vld [vmem:[%s248 + $0x60] sm:$0xf]
        %v287 = vld [vmem:[%s248 + $0x64] sm:$0xf]
        %v288 = vld [vmem:[%s248 + $0x68] sm:$0xf]
        %v289 = vld [vmem:[%s248 + $0x6c] sm:$0xf]
        %v290 = vld [vmem:[%s248 + $0x70] sm:$0xf]
        %v291 = vld [vmem:[%s248 + $0x74] sm:$0xf]
        %v292 = vld [vmem:[%s248 + $0x78] sm:$0xf]
        %v293 = vld [vmem:[%s248 + $0x7c] sm:$0xf]
        %v295 = vlaneseq
        %v296 = vshrl.u32 %v295, 7
        %v297 = vsub.s32 0, %v296
        %v298 = vrot.slane %v261, %v297
        %v332 = vunpack.c.l.b16 %v262
        %v333 = vunpack.c.l.b16 %v263
        %v334 = vunpack.c.l.b16 %v264
        %v335 = vunpack.c.l.b16 %v265
        %v336 = vunpack.c.l.b16 %v266
        %v337 = vunpack.c.l.b16 %v267
        %v338 = vunpack.c.l.b16 %v268
        %v339 = vunpack.c.l.b16 %v269
        %v340 = vunpack.c.l.b16 %v270
        %v341 = vunpack.c.l.b16 %v271
        %v342 = vunpack.c.l.b16 %v272
        %v343 = vunpack.c.l.b16 %v273
        %v344 = vunpack.c.l.b16 %v274
        %v345 = vunpack.c.l.b16 %v275
        %v346 = vunpack.c.l.b16 %v276
        %v347 = vunpack.c.l.b16 %v277
        %v348 = vunpack.c.l.b16 %v278
        %v349 = vunpack.c.l.b16 %v279
        %v350 = vunpack.c.l.b16 %v280
        %v351 = vunpack.c.l.b16 %v281
        %v352 = vunpack.c.l.b16 %v282
        %v353 = vunpack.c.l.b16 %v283
        %v354 = vunpack.c.l.b16 %v284
        %v355 = vunpack.c.l.b16 %v285
        %v356 = vunpack.c.l.b16 %v286
        %v357 = vunpack.c.l.b16 %v287
        %v358 = vunpack.c.l.b16 %v288
        %v359 = vunpack.c.l.b16 %v289
        %v360 = vunpack.c.l.b16 %v290
        %v361 = vunpack.c.l.b16 %v291
        %v362 = vunpack.c.l.b16 %v292
        %v363 = vunpack.c.l.b16 %v293
        %v364 = vpack.c.b16 %v333, %v332
        %v365 = vpack.c.b16 %v335, %v334
        %v366 = vpack.c.b16 %v337, %v336
        %v367 = vpack.c.b16 %v339, %v338
        %v368 = vpack.c.b16 %v341, %v340
        %v369 = vpack.c.b16 %v343, %v342
        %v370 = vpack.c.b16 %v345, %v344
        %v371 = vpack.c.b16 %v347, %v346
        %v372 = vpack.c.b16 %v349, %v348
        %v373 = vpack.c.b16 %v351, %v350
        %v374 = vpack.c.b16 %v353, %v352
        %v375 = vpack.c.b16 %v355, %v354
        %v376 = vpack.c.b16 %v357, %v356
        %v377 = vpack.c.b16 %v359, %v358
        %v378 = vpack.c.b16 %v361, %v360
        %v379 = vpack.c.b16 %v363, %v362
        %v385 = vunpack.c.l.b16 %v256
        %v386 = vunpack.c.l.b16 %v257
        %v387 = vunpack.c.l.b16 %v258
        %v388 = vunpack.c.l.b16 %v259
        %v389 = vunpack.c.l.b16 %v260
        %v390 = vpack.c.b16 %v386, %v385
        %v391 = vpack.c.b16 %v388, %v387
        %v392 = vpack.c.b16 %v389, %v389
        %vm395 = vcmask 293888
        %v397 = vsel %vm395, %v364, 0
        %v400 = vsel %vm395, %v365, 0
        %v403 = vsel %vm395, %v366, 0
        %v406 = vsel %vm395, %v367, 0
        %v409 = vsel %vm395, %v368, 0
        %v412 = vsel %vm395, %v369, 0
        %v415 = vsel %vm395, %v370, 0
        %v418 = vsel %vm395, %v371, 0
        %v421 = vsel %vm395, %v372, 0
        %v424 = vsel %vm395, %v373, 0
        %v427 = vsel %vm395, %v374, 0
        %v430 = vsel %vm395, %v375, 0
        %v433 = vsel %vm395, %v376, 0
        %v436 = vsel %vm395, %v377, 0
        %v439 = vsel %vm395, %v378, 0
        %v442 = vsel %vm395, %v379, 0
        %vm444 = vcmask 1041408
        %v446 = vsel %vm444, %v392, 0
        %448 = vmatprep.subr.bf16.mxu0 0
        %449 = vmatpush1.bf16.msra.mxu0 0
        %450 = vmatprep.subr.bf16.mxu0 0
        %451 = vmatpush1.bf16.msra.mxu0 0
        %452 = vmatprep.subr.bf16.mxu0 0
        %453 = vmatpush1.bf16.msra.mxu0 0
        %454 = vmatprep.subr.bf16.mxu0 0
        %455 = vmatpush1.bf16.msra.mxu0 0
        %456 = vmatprep.subr.bf16.mxu0 0
        %457 = vmatpush1.bf16.msra.mxu0 0
        %458 = vmatprep.subr.bf16.mxu0 0
        %459 = vmatpush1.bf16.msra.mxu0 %v446
        %460 = vmatprep.subr.bf16.mxu0 0
        %461 = vmatpush1.bf16.msra.mxu0 %v391
        %462 = vmatprep.subr.bf16.mxu0 0
        %463 = vmatpush1.bf16.msra.mxu0 %v390
        %464 = vmatprep.subr.bf16.mxu0 0
        %465 = vmatpush2.bf16.msra.mxu0 0
        %466 = vmatprep.subr.bf16.mxu0 0
        %467 = vmatpush2.bf16.msra.mxu0 0
        %468 = vmatprep.subr.bf16.mxu0 0
        %469 = vmatpush2.bf16.msra.mxu0 0
        %470 = vmatprep.subr.bf16.mxu0 0
        %471 = vmatpush2.bf16.msra.mxu0 0
        %472 = vmatprep.subr.bf16.mxu0 0
        %473 = vmatpush2.bf16.msra.mxu0 0
        %474 = vmatprep.subr.bf16.mxu0 0
        %475 = vmatpush2.bf16.msra.mxu0 0
        %476 = vmatprep.subr.bf16.mxu0 0
        %477 = vmatpush2.bf16.msra.mxu0 0
        %478 = vmatprep.subr.bf16.mxu0 0
        %479 = vmatpush2.bf16.msra.mxu0 0
        %480 = vmatprep.mubr.bf16.mxu0 0
        %481 = vmatmul.mubr.bf16.gmra.mxu0 %v397
        %v482 = vpop.f32.mrf.mxu0
        %v483 = vadd.f32 %v298, %v482
        %v484 = vpop.f32.mrf.mxu0
        %v485 = vpop.f32.mrf.mxu0
        %v486 = vadd.f32 %v298, %v485
        %v487 = vpop.f32.mrf.mxu0
        %488 = vmatprep.mubr.bf16.mxu0 0
        %489 = vmatmul.mubr.bf16.gmra.mxu0 %v400
        %v490 = vpop.f32.mrf.mxu0
        %v491 = vadd.f32 %v298, %v490
        %v492 = vpop.f32.mrf.mxu0
        %v493 = vpop.f32.mrf.mxu0
        %v494 = vadd.f32 %v298, %v493
        %v495 = vpop.f32.mrf.mxu0
        %496 = vmatprep.mubr.bf16.mxu0 0
        %497 = vmatmul.mubr.bf16.gmra.mxu0 %v403
        %v498 = vpop.f32.mrf.mxu0
        %v499 = vadd.f32 %v298, %v498
        %v500 = vpop.f32.mrf.mxu0
        %v501 = vpop.f32.mrf.mxu0
        %v502 = vadd.f32 %v298, %v501
        %v503 = vpop.f32.mrf.mxu0
        %504 = vmatprep.mubr.bf16.mxu0 0
        %505 = vmatmul.mubr.bf16.gmra.mxu0 %v406
        %v506 = vpop.f32.mrf.mxu0
        %v507 = vadd.f32 %v298, %v506
        %v508 = vpop.f32.mrf.mxu0
        %v509 = vpop.f32.mrf.mxu0
        %v510 = vadd.f32 %v298, %v509
        %v511 = vpop.f32.mrf.mxu0
        %512 = vmatprep.mubr.bf16.mxu0 0
        %513 = vmatmul.mubr.bf16.gmra.mxu0 %v409
        %v514 = vpop.f32.mrf.mxu0
        %v515 = vadd.f32 %v298, %v514
        %v516 = vpop.f32.mrf.mxu0
        %v517 = vpop.f32.mrf.mxu0
        %v518 = vadd.f32 %v298, %v517
        %v519 = vpop.f32.mrf.mxu0
        %520 = vmatprep.mubr.bf16.mxu0 0
        %521 = vmatmul.mubr.bf16.gmra.mxu0 %v412
        %v522 = vpop.f32.mrf.mxu0
        %v523 = vadd.f32 %v298, %v522
        %v524 = vpop.f32.mrf.mxu0
        %v525 = vpop.f32.mrf.mxu0
        %v526 = vadd.f32 %v298, %v525
        %v527 = vpop.f32.mrf.mxu0
        %528 = vmatprep.mubr.bf16.mxu0 0
        %529 = vmatmul.mubr.bf16.gmra.mxu0 %v415
        %v530 = vpop.f32.mrf.mxu0
        %v531 = vadd.f32 %v298, %v530
        %v532 = vpop.f32.mrf.mxu0
        %v533 = vpop.f32.mrf.mxu0
        %v534 = vadd.f32 %v298, %v533
        %v535 = vpop.f32.mrf.mxu0
        %536 = vmatprep.mubr.bf16.mxu0 0
        %537 = vmatmul.mubr.bf16.gmra.mxu0 %v418
        %v538 = vpop.f32.mrf.mxu0
        %v539 = vadd.f32 %v298, %v538
        %v540 = vpop.f32.mrf.mxu0
        %v541 = vpop.f32.mrf.mxu0
        %v542 = vadd.f32 %v298, %v541
        %v543 = vpop.f32.mrf.mxu0
        %544 = vmatprep.mubr.bf16.mxu0 0
        %545 = vmatmul.mubr.bf16.gmra.mxu0 %v421
        %v546 = vpop.f32.mrf.mxu0
        %v547 = vadd.f32 %v298, %v546
        %v548 = vpop.f32.mrf.mxu0
        %v549 = vpop.f32.mrf.mxu0
        %v550 = vadd.f32 %v298, %v549
        %v551 = vpop.f32.mrf.mxu0
        %552 = vmatprep.mubr.bf16.mxu0 0
        %553 = vmatmul.mubr.bf16.gmra.mxu0 %v424
        %v554 = vpop.f32.mrf.mxu0
        %v555 = vadd.f32 %v298, %v554
        %v556 = vpop.f32.mrf.mxu0
        %v557 = vpop.f32.mrf.mxu0
        %v558 = vadd.f32 %v298, %v557
        %v559 = vpop.f32.mrf.mxu0
        %560 = vmatprep.mubr.bf16.mxu0 0
        %561 = vmatmul.mubr.bf16.gmra.mxu0 %v427
        %v562 = vpop.f32.mrf.mxu0
        %v563 = vadd.f32 %v298, %v562
        %v564 = vpop.f32.mrf.mxu0
        %v565 = vpop.f32.mrf.mxu0
        %v566 = vadd.f32 %v298, %v565
        %v567 = vpop.f32.mrf.mxu0
        %568 = vmatprep.mubr.bf16.mxu0 0
        %569 = vmatmul.mubr.bf16.gmra.mxu0 %v430
        %v570 = vpop.f32.mrf.mxu0
        %v571 = vadd.f32 %v298, %v570
        %v572 = vpop.f32.mrf.mxu0
        %v573 = vpop.f32.mrf.mxu0
        %v574 = vadd.f32 %v298, %v573
        %v575 = vpop.f32.mrf.mxu0
        %576 = vmatprep.mubr.bf16.mxu0 0
        %577 = vmatmul.mubr.bf16.gmra.mxu0 %v433
        %v578 = vpop.f32.mrf.mxu0
        %v579 = vadd.f32 %v298, %v578
        %v580 = vpop.f32.mrf.mxu0
        %v581 = vpop.f32.mrf.mxu0
        %v582 = vadd.f32 %v298, %v581
        %v583 = vpop.f32.mrf.mxu0
        %584 = vmatprep.mubr.bf16.mxu0 0
        %585 = vmatmul.mubr.bf16.gmra.mxu0 %v436
        %v586 = vpop.f32.mrf.mxu0
        %v587 = vadd.f32 %v298, %v586
        %v588 = vpop.f32.mrf.mxu0
        %v589 = vpop.f32.mrf.mxu0
        %v590 = vadd.f32 %v298, %v589
        %v591 = vpop.f32.mrf.mxu0
        %592 = vmatprep.mubr.bf16.mxu0 0
        %593 = vmatmul.mubr.bf16.gmra.mxu0 %v439
        %v594 = vpop.f32.mrf.mxu0
        %v595 = vadd.f32 %v298, %v594
        %v596 = vpop.f32.mrf.mxu0
        %v597 = vpop.f32.mrf.mxu0
        %v598 = vadd.f32 %v298, %v597
        %v599 = vpop.f32.mrf.mxu0
        %600 = vmatprep.mubr.bf16.mxu0 0
        %601 = vmatmul.mubr.bf16.gmra.mxu0 %v442
        %v602 = vpop.f32.mrf.mxu0
        %v603 = vadd.f32 %v298, %v602
        %v604 = vpop.f32.mrf.mxu0
        %v605 = vpop.f32.mrf.mxu0
        %v606 = vadd.f32 %v298, %v605
        %v607 = vpop.f32.mrf.mxu0
        %608 = vdwg.mxu0
        %v609 = vmax.f32 %v483, 0.0
        %v610 = vmax.f32 %v486, 0.0
        %v611 = vmax.f32 %v491, 0.0
        %v612 = vmax.f32 %v494, 0.0
        %v613 = vmax.f32 %v499, 0.0
        %v614 = vmax.f32 %v502, 0.0
        %v615 = vmax.f32 %v507, 0.0
        %v616 = vmax.f32 %v510, 0.0
        %v617 = vmax.f32 %v515, 0.0
        %v618 = vmax.f32 %v518, 0.0
        %v619 = vmax.f32 %v523, 0.0
        %v620 = vmax.f32 %v526, 0.0
        %v621 = vmax.f32 %v531, 0.0
        %v622 = vmax.f32 %v534, 0.0
        %v623 = vmax.f32 %v539, 0.0
        %v624 = vmax.f32 %v542, 0.0
        %v625 = vmax.f32 %v547, 0.0
        %v626 = vmax.f32 %v550, 0.0
        %v627 = vmax.f32 %v555, 0.0
        %v628 = vmax.f32 %v558, 0.0
        %v629 = vmax.f32 %v563, 0.0
        %v630 = vmax.f32 %v566, 0.0
        %v631 = vmax.f32 %v571, 0.0
        %v632 = vmax.f32 %v574, 0.0
        %v633 = vmax.f32 %v579, 0.0
        %v634 = vmax.f32 %v582, 0.0
        %v635 = vmax.f32 %v587, 0.0
        %v636 = vmax.f32 %v590, 0.0
        %v637 = vmax.f32 %v595, 0.0
        %v638 = vmax.f32 %v598, 0.0
        %v639 = vmax.f32 %v603, 0.0
        %v640 = vmax.f32 %v606, 0.0
        %v641 = vld [vmem:[#allocation2] sm:$0x1]
        %v642 = vadd.f32 %v609, %v610
        %v643 = vadd.f32 %v642, %v611
        %v644 = vadd.f32 %v643, %v612
        %v645 = vadd.f32 %v644, %v613
        %v646 = vadd.f32 %v645, %v614
        %v647 = vadd.f32 %v646, %v615
        %v648 = vadd.f32 %v647, %v616
        %v649 = vadd.f32 %v648, %v617
        %v650 = vadd.f32 %v649, %v618
        %v651 = vadd.f32 %v650, %v619
        %v652 = vadd.f32 %v651, %v620
        %v653 = vadd.f32 %v652, %v621
        %v654 = vadd.f32 %v653, %v622
        %v655 = vadd.f32 %v654, %v623
        %v656 = vadd.f32 %v655, %v624
        %v657 = vadd.f32 %v656, %v625
        %v658 = vadd.f32 %v657, %v626
        %v659 = vadd.f32 %v658, %v627
        %v660 = vadd.f32 %v659, %v628
        %v661 = vadd.f32 %v660, %v629
        %v662 = vadd.f32 %v661, %v630
        %v663 = vadd.f32 %v662, %v631
        %v664 = vadd.f32 %v663, %v632
        %v665 = vadd.f32 %v664, %v633
        %v666 = vadd.f32 %v665, %v634
        %v667 = vadd.f32 %v666, %v635
        %v668 = vadd.f32 %v667, %v636
        %v669 = vadd.f32 %v668, %v637
        %v670 = vadd.f32 %v669, %v638
        %v671 = vadd.f32 %v670, %v639
        %v672 = vadd.f32 %v671, %v640
        %v673 = vrot.slane %v672, 4
        %v674 = vadd.f32 %v672, %v673
        %v675 = vrot.slane %v674, 2
        %v676 = vadd.f32 %v674, %v675
        %v677 = vrot.slane %v676, 1
        %v678 = vadd.f32 %v676, %v677
        %v679 = vadd.f32 %v641, %v678
        %680 = vst [vmem:[#allocation2] sm:$0x1] %v679
        // Predicated region
        $region45: #{tpu_custom_call.1} parent=39 // pred_check
          %p681 = pneg %p251
        $region46: #{tpu_custom_call.1} parent=39 // pred_check_branch
          %683 = sbr.rel (%p681) target = $region48
        $region47: #{tpu_custom_call.1} parent=39 // pred_region
          %v684 = vld [vmem:[#allocation2] sm:$0x1]
          %v685 = vmul.f32 %v684, 0.00390625
          %v686 = vld [vmem:[%s3] sm:$0xff]
          %v687 = vld [vmem:[%s3 + $0x8] sm:$0xff]
          %v688 = vld [vmem:[%s3 + $0x10] sm:$0xff]
          %v689 = vld [vmem:[%s3 + $0x18] sm:$0xff]
          %v690 = vld [vmem:[%s3 + $0x20] sm:$0xff]
          %v691 = vld [vmem:[%s3 + $0x28] sm:$0xff]
          %v692 = vld [vmem:[%s3 + $0x30] sm:$0xff]
          %v693 = vld [vmem:[%s3 + $0x38] sm:$0xff]
          %v694 = vld [vmem:[%s3 + $0x40] sm:$0xff]
          %v695 = vld [vmem:[%s3 + $0x48] sm:$0xff]
          %v696 = vld [vmem:[%s3 + $0x50] sm:$0xff]
          %v697 = vld [vmem:[%s3 + $0x58] sm:$0xff]
          %v698 = vld [vmem:[%s3 + $0x60] sm:$0xff]
          %v699 = vld [vmem:[%s3 + $0x68] sm:$0xff]
          %v700 = vld [vmem:[%s3 + $0x70] sm:$0xff]
          %v701 = vld [vmem:[%s3 + $0x78] sm:$0xff]
          %v702 = vld [vmem:[%s4] sm:$0x1]
          %703 = vmatprep.subr.mxu0 0.0
          %704 = vmatpush1.msra.mxu0 %v701
          %705 = vmatprep.subr.mxu0 0.0
          %706 = vmatpush1.msra.mxu0 %v700
          %707 = vmatprep.subr.mxu0 0.0
          %708 = vmatpush1.msra.mxu0 %v699
          %709 = vmatprep.subr.mxu0 0.0
          %710 = vmatpush1.msra.mxu0 %v698
          %711 = vmatprep.subr.mxu0 0.0
          %712 = vmatpush1.msra.mxu0 %v697
          %713 = vmatprep.subr.mxu0 0.0
          %714 = vmatpush1.msra.mxu0 %v696
          %715 = vmatprep.subr.mxu0 0.0
          %716 = vmatpush1.msra.mxu0 %v695
          %717 = vmatprep.subr.mxu0 0.0
          %718 = vmatpush1.msra.mxu0 %v694
          %719 = vmatprep.subr.mxu0 0.0
          %720 = vmatpush1.msra.mxu0 %v693
          %721 = vmatprep.subr.mxu0 0.0
          %722 = vmatpush1.msra.mxu0 %v692
          %723 = vmatprep.subr.mxu0 0.0
          %724 = vmatpush1.msra.mxu0 %v691
          %725 = vmatprep.subr.mxu0 0.0
          %726 = vmatpush1.msra.mxu0 %v690
          %727 = vmatprep.subr.mxu0 0.0
          %728 = vmatpush1.msra.mxu0 %v689
          %729 = vmatprep.subr.mxu0 0.0
          %730 = vmatpush1.msra.mxu0 %v688
          %731 = vmatprep.subr.mxu0 0.0
          %732 = vmatpush1.msra.mxu0 %v687
          %733 = vmatprep.subr.mxu0 0.0
          %734 = vmatpush1.msra.mxu0 %v686
          %735 = vmatprep.subr.mxu0 0.0
          %736 = vmatpush2.msra.mxu0 0.0
          %737 = vmatprep.subr.mxu0 0.0
          %738 = vmatpush2.msra.mxu0 0.0
          %739 = vmatprep.subr.mxu0 0.0
          %740 = vmatpush2.msra.mxu0 0.0
          %741 = vmatprep.subr.mxu0 0.0
          %742 = vmatpush2.msra.mxu0 0.0
          %743 = vmatprep.subr.mxu0 0.0
          %744 = vmatpush2.msra.mxu0 0.0
          %745 = vmatprep.subr.mxu0 0.0
          %746 = vmatpush2.msra.mxu0 0.0
          %747 = vmatprep.subr.mxu0 0.0
          %748 = vmatpush2.msra.mxu0 0.0
          %749 = vmatprep.subr.mxu0 0.0
          %750 = vmatpush2.msra.mxu0 0.0
          %751 = vmatprep.subr.mxu0 0.0
          %752 = vmatpush2.msra.mxu0 0.0
          %753 = vmatprep.subr.mxu0 0.0
          %754 = vmatpush2.msra.mxu0 0.0
          %755 = vmatprep.subr.mxu0 0.0
          %756 = vmatpush2.msra.mxu0 0.0
          %757 = vmatprep.subr.mxu0 0.0
          %758 = vmatpush2.msra.mxu0 0.0
          %759 = vmatprep.subr.mxu0 0.0
          %760 = vmatpush2.msra.mxu0 0.0
          %761 = vmatprep.subr.mxu0 0.0
          %762 = vmatpush2.msra.mxu0 0.0
          %763 = vmatprep.subr.mxu0 0.0
          %764 = vmatpush2.msra.mxu0 0.0
          %765 = vmatprep.subr.mxu0 0.0
          %766 = vmatpush2.msra.mxu0 0.0
          %767 = vmatprep.mubr.f32.mxu0 0.0
          %768 = vmatmul.mubr.f32.gmra.mxu0 %v685
          %v769 = vpop.f32.mrf.mxu0
          %v770 = vadd.f32 %v702, %v769
          %v771 = vpop.f32.mrf.mxu0
          %772 = vdwg.mxu0
          %773 = vst [vmem:[%s239] sm:$0x1] %v770
        $region48: #{tpu_custom_call.1} parent=39 // pred_fallthru
          _
        %s774 = sand.u32 %s151, 1
        %s775 = scalar_lea.sflag [#allocation4], %s774
        %s776 = sand.u32 %s151, 1
        %s777 = scalar_lea.vmem [#allocation3], %s776
        // Predicated region
        $region49: #{tpu_custom_call.1} parent=39 // pred_check
          %p778 = pneg %p161
        $region50: #{tpu_custom_call.1} parent=39 // pred_check_branch
          %780 = sbr.rel (%p778) target = $region52
        $region51: #{tpu_custom_call.1} parent=39 // pred_region
          %s782 = ssub.s32 16, 16
          %783 = vsyncadd %s775, %s782
          %s784 = smul.addr %s23, 16
          %s785 = scalar_lea.hbm %s5, %s784
          %s787 = sshll.u32 %s777, 4
          %s788 = int_to_ptr.vmem [resolvable:$true] %s787
          %790 = dma.vmem_to_hbm [thread:$0]  %s788, 16, %s785, %s775
        $region52: #{tpu_custom_call.1} parent=39 // pred_fallthru
          _
      $region40: #{tpu_custom_call.1} parent=5 // pred_fallthru
        _
      %p791 = scmp.le.s32.totalorder 2, %s14
      // Predicated region
      $region53: #{tpu_custom_call.1} parent=5 // pred_check
        %p792 = pneg %p791
      $region54: #{tpu_custom_call.1} parent=5 // pred_check_branch
        %794 = sbr.rel (%p792) target = $region56
      $region55: #{tpu_custom_call.1} parent=5 // pred_region
        %s795 = ssub.s32 %s14, 2
        // Predicated region
        $region57: #{tpu_custom_call.1} parent=55 // pred_check
          %p796 = pneg %p167
        $region58: #{tpu_custom_call.1} parent=55 // pred_check_branch
          %798 = sbr.rel (%p796) target = $region60
        $region59: #{tpu_custom_call.1} parent=55 // pred_region
          %s799 = sand.u32 %s152, 1
          %s800 = scalar_lea.sflag [#allocation4], %s799
          %s801 = sand.u32 %s152, 1
          %s802 = scalar_lea.vmem [#allocation3], %s801
          %803 = dma.done %s800, 16
        $region60: #{tpu_custom_call.1} parent=55 // pred_fallthru
          _
      $region56: #{tpu_custom_call.1} parent=5 // pred_fallthru
        _
    $region6: #{tpu_custom_call.1} parent=1 // loop_footer
      %s18 = sadd.s32 1, %s14
    $region7: #{tpu_custom_call.1} parent=1 // loop_footer_branch
      %13 = sbr.rel target = $region3
    $region8: #{tpu_custom_call.1} parent=1 // loop_exit
      _
    %804 = vsyncpa [#allocation4], 1
    %s805 = scalar_lea.sflag [#allocation4], 1
    %806 = vsyncpa %s805, 1

</llo_original>
